<compile_context>
chip_gen: v7x
topology: tpu7x:2x2x1
jax: 0.10.0
libtpu: 0.0.40
codegen_flags: <defaults>
</compile_context>

<pallas_src>
import jax
import jax.numpy as jnp
from jax import lax
from jax.experimental import pallas as pl
from jax.experimental.pallas import tpu as pltpu

LATENT_DIM = 128
PROJECTION_DIM = 64

SUBLANE = 8


def _cdiv(a, b):
    return -(-a // b)


def _round_up(x, m):
    return ((x + m - 1) // m) * m


def projection_head_kernel(x_ref, w1_ref, b1_ref, w2_ref, b2_ref, o_ref):
    # fc1 + relu (MXU in the operands' native dtype, f32 accumulation)
    x = x_ref[...]
    h = jnp.dot(x, w1_ref[...], preferred_element_type=jnp.float32) + b1_ref[...]
    h = jnp.maximum(h, 0.0)
    # fc2 (feed the accumulator back at the weights' dtype)
    y = (jnp.dot(h.astype(w2_ref.dtype), w2_ref[...],
                 preferred_element_type=jnp.float32) + b2_ref[...])
    # F.normalize(p=2, dim=1): y / max(||y||, 1e-12)
    #   == y * rsqrt(max(sum(y^2), 1e-24))   (sqrt is monotone)
    sq = jnp.sum(y * y, axis=-1, keepdims=True)
    inv = lax.rsqrt(jnp.maximum(sq, 1e-24))
    o_ref[...] = (y * inv).astype(o_ref.dtype)


def projection_head(x, w1, b1, w2, b2, *, tb=4096, io_dtype=None):
    """x: (B, latent_dim). w1: (latent, latent), w2: (latent, proj) — already
    transposed relative to PyTorch's (out, in) convention.  b1: (latent,) or
    (1, latent); b2: (proj,) or (1, proj).

    io_dtype: optionally cast streamed operands (x, weights, biases, output)
    to a narrower dtype (e.g. jnp.bfloat16) to halve HBM traffic; the matmul
    accumulation and normalization math stay in f32 inside the kernel.
    """
    B, D_in = x.shape
    D_hid = w1.shape[1]
    D_out = w2.shape[1]
    assert D_in == w1.shape[0] and D_hid == w2.shape[0]

    if io_dtype is not None:
        x = x.astype(io_dtype)
        w1 = w1.astype(io_dtype)
        w2 = w2.astype(io_dtype)
        b1 = b1.astype(io_dtype)
        b2 = b2.astype(io_dtype)

    b1 = jnp.reshape(b1, (1, D_hid))
    b2 = jnp.reshape(b2, (1, D_out))

    # --- batch tiling: minimize padding, keep >=2 tiles for v7x megacore ----
    n_tiles = _cdiv(B, tb)
    if n_tiles < 2 and B >= 1024:
        n_tiles = 2              # let the "parallel" axis span both v7x TCs
    TB = _round_up(_cdiv(B, n_tiles), SUBLANE)
    B_pad = n_tiles * TB
    if B_pad != B:
        x = jnp.pad(x, ((0, B_pad - B), (0, 0)))

    x_bytes = jnp.dtype(x.dtype).itemsize
    w_bytes = jnp.dtype(w1.dtype).itemsize
    cost = pl.CostEstimate(
        flops=int(B_pad * (2 * D_in * D_hid + 2 * D_hid * D_out)),
        transcendentals=int(B_pad),  # one rsqrt per row
        bytes_accessed=int(
            B_pad * D_in * x_bytes                       # x in
            + B_pad * D_out * x_bytes                    # out
            + (D_in * D_hid + D_hid * D_out) * w_bytes   # weights
            + (D_hid + D_out) * jnp.dtype(b1.dtype).itemsize),
    )

    out = pl.pallas_call(
        projection_head_kernel,
        out_shape=jax.ShapeDtypeStruct((B_pad, D_out), x.dtype),
        grid_spec=pltpu.PrefetchScalarGridSpec(
            num_scalar_prefetch=0,
            grid=(n_tiles,),
            in_specs=[
                pl.BlockSpec((TB, D_in), lambda i: (i, 0)),
                pl.BlockSpec((D_in, D_hid), lambda i: (0, 0)),
                pl.BlockSpec((1, D_hid), lambda i: (0, 0)),
                pl.BlockSpec((D_hid, D_out), lambda i: (0, 0)),
                pl.BlockSpec((1, D_out), lambda i: (0, 0)),
            ],
            out_specs=pl.BlockSpec((TB, D_out), lambda i: (i, 0)),
        ),
        compiler_params=pltpu.CompilerParams(
            dimension_semantics=("parallel",)),
        cost_estimate=cost,
    )(x, w1, b1, w2, b2)

    return out if B_pad == B else out[:B]


def reference(x, w1, b1, w2, b2):
    h = jnp.maximum(x @ w1 + jnp.reshape(b1, (1, -1)), 0.0)
    y = h @ w2 + jnp.reshape(b2, (1, -1))
    n = jnp.maximum(jnp.linalg.norm(y, axis=1, keepdims=True), 1e-12)
    return y / n


if __name__ == "__main__":
    key = jax.random.PRNGKey(0)
    kx, k1, kb1, k2, kb2 = jax.random.split(key, 5)

    B = 8
    x = jax.random.normal(kx, (B, LATENT_DIM), dtype=jnp.float32)

    # Deterministic synthetic parameters (PyTorch Linear shapes are (out, in)
    # for weights; we store the transpose (in, out) for the kernel).
    bound1 = 1.0 / (LATENT_DIM ** 0.5)
    w1 = jax.random.uniform(k1, (LATENT_DIM, LATENT_DIM), jnp.float32,
                            minval=-bound1, maxval=bound1)  # (in, out)
    b1 = jax.random.uniform(kb1, (1, LATENT_DIM), jnp.float32,
                            minval=-bound1, maxval=bound1)
    bound2 = 1.0 / (LATENT_DIM ** 0.5)
    w2 = jax.random.uniform(k2, (LATENT_DIM, PROJECTION_DIM), jnp.float32,
                            minval=-bound2, maxval=bound2)  # (in, out)
    b2 = jax.random.uniform(kb2, (1, PROJECTION_DIM), jnp.float32,
                            minval=-bound2, maxval=bound2)

    out = projection_head(x, w1, b1, w2, b2)
    out = jax.block_until_ready(out)

    ref = reference(x, w1, b1, w2, b2)
    assert out.shape == (B, PROJECTION_DIM)
    assert jnp.allclose(out, ref, atol=1e-5, rtol=1e-5)

    print("KERNEL_OK")
</pallas_src>

<mosaic_0001>
module attributes {stable_mosaic.version = 11 : i64} {
  func.func @projection_head_kernel(%arg0: i32, %arg1: memref<8x128xf32, #tpu.memory_space<vmem>>, %arg2: memref<128x128xf32, #tpu.memory_space<vmem>>, %arg3: memref<1x128xf32, #tpu.memory_space<vmem>>, %arg4: memref<128x64xf32, #tpu.memory_space<vmem>>, %arg5: memref<1x64xf32, #tpu.memory_space<vmem>>, %arg6: memref<8x64xf32, #tpu.memory_space<vmem>>) attributes {dimension_semantics = [#tpu.dimension_semantics<parallel>], iteration_bounds = array<i64: 1>, scalar_prefetch = 0 : i64, scratch_operands = 0 : i64, tpu.core_type = #tpu.core_type<tc>, window_params = [{transform_indices = @transform_0, window_bounds = array<i64: 8, 128>}, {pipeline_mode = #tpu.pipeline_mode<synchronous>, transform_indices = @transform_1, window_bounds = array<i64: 128, 128>}, {pipeline_mode = #tpu.pipeline_mode<synchronous>, transform_indices = @transform_2, window_bounds = array<i64: 1, 128>}, {pipeline_mode = #tpu.pipeline_mode<synchronous>, transform_indices = @transform_3, window_bounds = array<i64: 128, 64>}, {pipeline_mode = #tpu.pipeline_mode<synchronous>, transform_indices = @transform_4, window_bounds = array<i64: 1, 64>}, {transform_indices = @transform_5, window_bounds = array<i64: 8, 64>}]} {
    %c0 = arith.constant 0 : index
    %c0_0 = arith.constant 0 : index
    %0 = vector.load %arg1[%c0, %c0_0] : memref<8x128xf32, #tpu.memory_space<vmem>>, vector<8x128xf32>
    %c0_1 = arith.constant 0 : index
    %c0_2 = arith.constant 0 : index
    %1 = vector.load %arg2[%c0_1, %c0_2] : memref<128x128xf32, #tpu.memory_space<vmem>>, vector<128x128xf32>
    %cst = arith.constant dense<0.000000e+00> : vector<8x128xf32>
    %2 = tpu.matmul %0, %1, %cst {dimension_numbers = #tpu.dot_dimension_numbers<[1], [0], [0], [1], [0, 0, 1, 1], [], []>} : vector<8x128xf32>, vector<128x128xf32>, vector<8x128xf32> -> vector<8x128xf32>
    %c0_3 = arith.constant 0 : index
    %c0_4 = arith.constant 0 : index
    %3 = vector.load %arg3[%c0_3, %c0_4] : memref<1x128xf32, #tpu.memory_space<vmem>>, vector<1x128xf32>
    %4 = vector.broadcast %3 : vector<1x128xf32> to vector<8x128xf32>
    %5 = arith.addf %2, %4 : vector<8x128xf32>
    %cst_5 = arith.constant 0.000000e+00 : f32
    %6 = vector.broadcast %cst_5 : f32 to vector<8x128xf32>
    %7 = arith.maximumf %5, %6 : vector<8x128xf32>
    %c0_6 = arith.constant 0 : index
    %c0_7 = arith.constant 0 : index
    %8 = vector.load %arg4[%c0_6, %c0_7] : memref<128x64xf32, #tpu.memory_space<vmem>>, vector<128x64xf32>
    %cst_8 = arith.constant dense<0.000000e+00> : vector<8x64xf32>
    %9 = tpu.matmul %7, %8, %cst_8 {dimension_numbers = #tpu.dot_dimension_numbers<[1], [0], [0], [1], [0, 0, 1, 1], [], []>} : vector<8x128xf32>, vector<128x64xf32>, vector<8x64xf32> -> vector<8x64xf32>
    %c0_9 = arith.constant 0 : index
    %c0_10 = arith.constant 0 : index
    %10 = vector.load %arg5[%c0_9, %c0_10] : memref<1x64xf32, #tpu.memory_space<vmem>>, vector<1x64xf32>
    %11 = vector.broadcast %10 : vector<1x64xf32> to vector<8x64xf32>
    %12 = arith.addf %9, %11 : vector<8x64xf32>
    %13 = arith.mulf %12, %12 : vector<8x64xf32>
    %cst_11 = arith.constant dense<0.000000e+00> : vector<8xf32>
    %14 = vector.multi_reduction <add>, %13, %cst_11 [1] : vector<8x64xf32> to vector<8xf32>
    %15 = vector.shape_cast %14 : vector<8xf32> to vector<8x1xf32>
    %cst_12 = arith.constant 1.000000e-24 : f32
    %16 = vector.broadcast %cst_12 : f32 to vector<8x1xf32>
    %17 = arith.maximumf %15, %16 : vector<8x1xf32>
    %18 = math.rsqrt %17 : vector<8x1xf32>
    %19 = vector.broadcast %18 : vector<8x1xf32> to vector<8x64xf32>
    %20 = arith.mulf %12, %19 : vector<8x64xf32>
    %c0_13 = arith.constant 0 : index
    %c0_14 = arith.constant 0 : index
    %21 = vector.load %arg6[%c0_13, %c0_14] : memref<8x64xf32, #tpu.memory_space<vmem>>, vector<8x64xf32>
    tpu.vector_store %arg6[%c0_13, %c0_14], %20 {strides = array<i32>} : memref<8x64xf32, #tpu.memory_space<vmem>>, vector<8x64xf32>,
    return
  }
  func.func @transform_0(%arg0: i32) -> (i32, i32) {
    %c0_i32 = arith.constant 0 : i32
    %c0_i32_0 = arith.constant 0 : i32
    return %arg0, %c0_i32 : i32, i32
  }
  func.func @transform_1(%arg0: i32) -> (i32, i32) {
    %c0_i32 = arith.constant 0 : i32
    %c0_i32_0 = arith.constant 0 : i32
    %c0_i32_1 = arith.constant 0 : i32
    return %c0_i32, %c0_i32_0 : i32, i32
  }
  func.func @transform_2(%arg0: i32) -> (i32, i32) {
    %c0_i32 = arith.constant 0 : i32
    %c0_i32_0 = arith.constant 0 : i32
    %c0_i32_1 = arith.constant 0 : i32
    return %c0_i32, %c0_i32_0 : i32, i32
  }
  func.func @transform_3(%arg0: i32) -> (i32, i32) {
    %c0_i32 = arith.constant 0 : i32
    %c0_i32_0 = arith.constant 0 : i32
    %c0_i32_1 = arith.constant 0 : i32
    return %c0_i32, %c0_i32_0 : i32, i32
  }
  func.func @transform_4(%arg0: i32) -> (i32, i32) {
    %c0_i32 = arith.constant 0 : i32
    %c0_i32_0 = arith.constant 0 : i32
    %c0_i32_1 = arith.constant 0 : i32
    return %c0_i32, %c0_i32_0 : i32, i32
  }
  func.func @transform_5(%arg0: i32) -> (i32, i32) {
    %c0_i32 = arith.constant 0 : i32
    %c0_i32_0 = arith.constant 0 : i32
    return %arg0, %c0_i32 : i32, i32
  }
}

</mosaic_0001>

<llo_original>
// kernel: tpu_custom_call.1
$region0: #{tpu_custom_call.1}
  #allocation0 [shape = 'u32[]', space=smem, size = 0x4, offset = 0x4, fixed_abs, tag = 'smem constant byte address 0x4 - core index']
  #allocation1 [shape = 'u32[144,128]{1,0:T(1,128)}', space=vmem, size = 0x12000, scoped, tag = 'internal scratch']
  %s0 = inlined_call_operand.vmem [shape: f32[8,128], index: 0, kind: input, shape index: {}]
  %s1 = inlined_call_operand.vmem [shape: f32[128,128], index: 1, kind: input, shape index: {}]
  %s2 = inlined_call_operand.vmem [shape: f32[1,128], index: 2, kind: input, shape index: {}]
  %s3 = inlined_call_operand.vmem [shape: f32[128,64], index: 3, kind: input, shape index: {}]
  %s4 = inlined_call_operand.vmem [shape: f32[1,64], index: 4, kind: input, shape index: {}]
  %s5 = inlined_call_operand.hbm [shape: f32[8,64], index: 5, kind: output, shape index: {}]
  %s6 = sld [smem:[#allocation0]]
  $region30: #{tpu_custom_call.1} parent=0
    _
  %s8 = ssub.s32 1, %s6
  %s9 = scalar_select 0, %s8, %s6
  $region1: #{tpu_custom_call.1} parent=0
    #allocation2 [shape = 'u8[4096]{0}', space=vmem, size = 0x1000, scoped, tag = 'output window, operand 0, single buffered']
    #allocation3 [shape = 's32[1]{0}', space=sflag, size = 0x4, scoped, tag = 'scoped memory for tpu_custom_call.1']
    %10 = vsyncpa [#allocation3], 0
    // Predicated region
    $region2: #{tpu_custom_call.1} parent=1 // pred_check
      _
    $region3: #{tpu_custom_call.1} parent=1 // pred_check_branch
      %12 = sbr.rel (0) target = $region5
    $region4: #{tpu_custom_call.1} parent=1 // pred_region
      _
    $region5: #{tpu_custom_call.1} parent=1 // pred_fallthru
      _
    // Predicated region
    $region6: #{tpu_custom_call.1} parent=1 // pred_check
      _
    $region7: #{tpu_custom_call.1} parent=1 // pred_check_branch
      %14 = sbr.rel (0) target = $region9
    $region8: #{tpu_custom_call.1} parent=1 // pred_region
      _
    $region9: #{tpu_custom_call.1} parent=1 // pred_fallthru
      _
    // Predicated region
    $region10: #{tpu_custom_call.1} parent=1 // pred_check
      _
    $region11: #{tpu_custom_call.1} parent=1 // pred_check_branch
      %16 = sbr.rel (0) target = $region13
    $region12: #{tpu_custom_call.1} parent=1 // pred_region
      _
    $region13: #{tpu_custom_call.1} parent=1 // pred_fallthru
      _
    // Predicated region
    $region14: #{tpu_custom_call.1} parent=1 // pred_check
      _
    $region15: #{tpu_custom_call.1} parent=1 // pred_check_branch
      %18 = sbr.rel (0) target = $region17
    $region16: #{tpu_custom_call.1} parent=1 // pred_region
      _
    $region17: #{tpu_custom_call.1} parent=1 // pred_fallthru
      _
    // Predicated region
    $region18: #{tpu_custom_call.1} parent=1 // pred_check
      _
    $region19: #{tpu_custom_call.1} parent=1 // pred_check_branch
      %20 = sbr.rel (0) target = $region21
    $region20: #{tpu_custom_call.1} parent=1 // pred_region
      _
    $region21: #{tpu_custom_call.1} parent=1 // pred_fallthru
      _
    %v21 = vld [vmem:[%s0] sm:$0xff]
    %v22 = vld [vmem:[%s1] sm:$0xff]
    %v23 = vld [vmem:[%s1 + $0x8] sm:$0xff]
    %v24 = vld [vmem:[%s1 + $0x10] sm:$0xff]
    %v25 = vld [vmem:[%s1 + $0x18] sm:$0xff]
    %v26 = vld [vmem:[%s1 + $0x20] sm:$0xff]
    %v27 = vld [vmem:[%s1 + $0x28] sm:$0xff]
    %v28 = vld [vmem:[%s1 + $0x30] sm:$0xff]
    %v29 = vld [vmem:[%s1 + $0x38] sm:$0xff]
    %v30 = vld [vmem:[%s1 + $0x40] sm:$0xff]
    %v31 = vld [vmem:[%s1 + $0x48] sm:$0xff]
    %v32 = vld [vmem:[%s1 + $0x50] sm:$0xff]
    %v33 = vld [vmem:[%s1 + $0x58] sm:$0xff]
    %v34 = vld [vmem:[%s1 + $0x60] sm:$0xff]
    %v35 = vld [vmem:[%s1 + $0x68] sm:$0xff]
    %v36 = vld [vmem:[%s1 + $0x70] sm:$0xff]
    %v37 = vld [vmem:[%s1 + $0x78] sm:$0xff]
    %v38 = vld [vmem:[%s2] sm:$0x1]
    %v40 = vlaneseq
    %v41 = vshrl.u32 %v40, 7
    %v42 = vsub.s32 0, %v41
    %v43 = vrot.slane %v38, %v42
    %45 = vmatprep.subr.mxu0 0.0
    %46 = vmatpush1.msra.mxu0 %v22
    %47 = vmatprep.subr.mxu0 0.0
    %48 = vmatpush1.msra.mxu0 %v23
    %49 = vmatprep.subr.mxu0 0.0
    %50 = vmatpush1.msra.mxu0 %v24
    %51 = vmatprep.subr.mxu0 0.0
    %52 = vmatpush1.msra.mxu0 %v25
    %53 = vmatprep.subr.mxu0 0.0
    %54 = vmatpush1.msra.mxu0 %v26
    %55 = vmatprep.subr.mxu0 0.0
    %56 = vmatpush1.msra.mxu0 %v27
    %57 = vmatprep.subr.mxu0 0.0
    %58 = vmatpush1.msra.mxu0 %v28
    %59 = vmatprep.subr.mxu0 0.0
    %60 = vmatpush1.msra.mxu0 %v29
    %61 = vmatprep.subr.mxu0 0.0
    %62 = vmatpush1.msra.mxu0 %v30
    %63 = vmatprep.subr.mxu0 0.0
    %64 = vmatpush1.msra.mxu0 %v31
    %65 = vmatprep.subr.mxu0 0.0
    %66 = vmatpush1.msra.mxu0 %v32
    %67 = vmatprep.subr.mxu0 0.0
    %68 = vmatpush1.msra.mxu0 %v33
    %69 = vmatprep.subr.mxu0 0.0
    %70 = vmatpush1.msra.mxu0 %v34
    %71 = vmatprep.subr.mxu0 0.0
    %72 = vmatpush1.msra.mxu0 %v35
    %73 = vmatprep.subr.mxu0 0.0
    %74 = vmatpush1.msra.mxu0 %v36
    %75 = vmatprep.subr.mxu0 0.0
    %76 = vmatpush1.msra.mxu0 %v37
    %77 = vmatprep.subr.mxu0 0.0
    %78 = vmatpush1.msra.mxu0 0.0
    %79 = vmatprep.subr.mxu0 0.0
    %80 = vmatpush1.msra.mxu0 0.0
    %81 = vmatprep.subr.mxu0 0.0
    %82 = vmatpush1.msra.mxu0 0.0
    %83 = vmatprep.subr.mxu0 0.0
    %84 = vmatpush1.msra.mxu0 0.0
    %85 = vmatprep.subr.mxu0 0.0
    %86 = vmatpush1.msra.mxu0 0.0
    %87 = vmatprep.subr.mxu0 0.0
    %88 = vmatpush1.msra.mxu0 0.0
    %89 = vmatprep.subr.mxu0 0.0
    %90 = vmatpush1.msra.mxu0 0.0
    %91 = vmatprep.subr.mxu0 0.0
    %92 = vmatpush1.msra.mxu0 0.0
    %93 = vmatprep.subr.mxu0 0.0
    %94 = vmatpush1.msra.mxu0 0.0
    %95 = vmatprep.subr.mxu0 0.0
    %96 = vmatpush1.msra.mxu0 0.0
    %97 = vmatprep.subr.mxu0 0.0
    %98 = vmatpush1.msra.mxu0 0.0
    %99 = vmatprep.subr.mxu0 0.0
    %100 = vmatpush1.msra.mxu0 0.0
    %101 = vmatprep.subr.mxu0 0.0
    %102 = vmatpush1.msra.mxu0 0.0
    %103 = vmatprep.subr.mxu0 0.0
    %104 = vmatpush1.msra.mxu0 0.0
    %105 = vmatprep.subr.mxu0 0.0
    %106 = vmatpush1.msra.mxu0 0.0
    %107 = vmatprep.subr.mxu0 0.0
    %108 = vmatpush1.msra.mxu0 0.0
    %109 = vmatprep.mubr.f32.mxu0 0.0
    %110 = vmatmul.mubr.f32.gmra.mrb[0].mxu0 %v21
    %v111 = vpop.f32.mrb[0].mxu0
    %v112 = vadd.f32 %v43, %v111
    %v113 = vpop.f32.mrb[0].mxu0
    %114 = vdwg.mxu0
    %v115 = vmax.f32 %v112, 0.0
    %v116 = vld [vmem:[%s3] sm:$0xff]
    %v117 = vld [vmem:[%s3 + $0x8] sm:$0xff]
    %v118 = vld [vmem:[%s3 + $0x10] sm:$0xff]
    %v119 = vld [vmem:[%s3 + $0x18] sm:$0xff]
    %v120 = vld [vmem:[%s3 + $0x20] sm:$0xff]
    %v121 = vld [vmem:[%s3 + $0x28] sm:$0xff]
    %v122 = vld [vmem:[%s3 + $0x30] sm:$0xff]
    %v123 = vld [vmem:[%s3 + $0x38] sm:$0xff]
    %v124 = vld [vmem:[%s3 + $0x40] sm:$0xff]
    %v125 = vld [vmem:[%s3 + $0x48] sm:$0xff]
    %v126 = vld [vmem:[%s3 + $0x50] sm:$0xff]
    %v127 = vld [vmem:[%s3 + $0x58] sm:$0xff]
    %v128 = vld [vmem:[%s3 + $0x60] sm:$0xff]
    %v129 = vld [vmem:[%s3 + $0x68] sm:$0xff]
    %v130 = vld [vmem:[%s3 + $0x70] sm:$0xff]
    %v131 = vld [vmem:[%s3 + $0x78] sm:$0xff]
    %v132 = vld [vmem:[%s4] sm:$0x1]
    %v134 = vlaneseq
    %v135 = vshrl.u32 %v134, 7
    %v136 = vsub.s32 0, %v135
    %v137 = vrot.slane %v132, %v136
    %139 = vmatprep.subr.mxu0 0.0
    %140 = vmatpush1.msra.mxu0 %v116
    %141 = vmatprep.subr.mxu0 0.0
    %142 = vmatpush1.msra.mxu0 %v117
    %143 = vmatprep.subr.mxu0 0.0
    %144 = vmatpush1.msra.mxu0 %v118
    %145 = vmatprep.subr.mxu0 0.0
    %146 = vmatpush1.msra.mxu0 %v119
    %147 = vmatprep.subr.mxu0 0.0
    %148 = vmatpush1.msra.mxu0 %v120
    %149 = vmatprep.subr.mxu0 0.0
    %150 = vmatpush1.msra.mxu0 %v121
    %151 = vmatprep.subr.mxu0 0.0
    %152 = vmatpush1.msra.mxu0 %v122
    %153 = vmatprep.subr.mxu0 0.0
    %154 = vmatpush1.msra.mxu0 %v123
    %155 = vmatprep.subr.mxu0 0.0
    %156 = vmatpush1.msra.mxu0 %v124
    %157 = vmatprep.subr.mxu0 0.0
    %158 = vmatpush1.msra.mxu0 %v125
    %159 = vmatprep.subr.mxu0 0.0
    %160 = vmatpush1.msra.mxu0 %v126
    %161 = vmatprep.subr.mxu0 0.0
    %162 = vmatpush1.msra.mxu0 %v127
    %163 = vmatprep.subr.mxu0 0.0
    %164 = vmatpush1.msra.mxu0 %v128
    %165 = vmatprep.subr.mxu0 0.0
    %166 = vmatpush1.msra.mxu0 %v129
    %167 = vmatprep.subr.mxu0 0.0
    %168 = vmatpush1.msra.mxu0 %v130
    %169 = vmatprep.subr.mxu0 0.0
    %170 = vmatpush1.msra.mxu0 %v131
    %171 = vmatprep.subr.mxu0 0.0
    %172 = vmatpush1.msra.mxu0 0.0
    %173 = vmatprep.subr.mxu0 0.0
    %174 = vmatpush1.msra.mxu0 0.0
    %175 = vmatprep.subr.mxu0 0.0
    %176 = vmatpush1.msra.mxu0 0.0
    %177 = vmatprep.subr.mxu0 0.0
    %178 = vmatpush1.msra.mxu0 0.0
    %179 = vmatprep.subr.mxu0 0.0
    %180 = vmatpush1.msra.mxu0 0.0
    %181 = vmatprep.subr.mxu0 0.0
    %182 = vmatpush1.msra.mxu0 0.0
    %183 = vmatprep.subr.mxu0 0.0
    %184 = vmatpush1.msra.mxu0 0.0
    %185 = vmatprep.subr.mxu0 0.0
    %186 = vmatpush1.msra.mxu0 0.0
    %187 = vmatprep.subr.mxu0 0.0
    %188 = vmatpush1.msra.mxu0 0.0
    %189 = vmatprep.subr.mxu0 0.0
    %190 = vmatpush1.msra.mxu0 0.0
    %191 = vmatprep.subr.mxu0 0.0
    %192 = vmatpush1.msra.mxu0 0.0
    %193 = vmatprep.subr.mxu0 0.0
    %194 = vmatpush1.msra.mxu0 0.0
    %195 = vmatprep.subr.mxu0 0.0
    %196 = vmatpush1.msra.mxu0 0.0
    %197 = vmatprep.subr.mxu0 0.0
    %198 = vmatpush1.msra.mxu0 0.0
    %199 = vmatprep.subr.mxu0 0.0
    %200 = vmatpush1.msra.mxu0 0.0
    %201 = vmatprep.subr.mxu0 0.0
    %202 = vmatpush1.msra.mxu0 0.0
    %203 = vmatprep.mubr.f32.mxu0 0.0
    %204 = vmatmul.mubr.f32.gmra.mrb[0].mxu0 %v115
    %v205 = vpop.f32.mrb[0].mxu0
    %v206 = vadd.f32 %v137, %v205
    %v207 = vpop.f32.mrb[0].mxu0
    %208 = vdwg.mxu0
    %v209 = vmul.f32 %v206, %v206
    %vm210 = vcmask 523264
    %v211 = vsel %vm210, %v209, 0.0
    %212 = vadd.xlane.f32.xlu0 %v211
    %v213 = vpop.xlane.xlu0 %212
    %v214 = vmax.f32 %v213, 1e-24
    %v215 = vrsqrt.pop %v214
    %v216 = vmul.f32 %v206, %v215
    %217 = vst.msk [vmem:[#allocation2] sm:$0xff] %vm210, %v216
    // Predicated region
    $region22: #{tpu_custom_call.1} parent=1 // pred_check
      _
    $region23: #{tpu_custom_call.1} parent=1 // pred_check_branch
      %219 = sbr.rel (0) target = $region25
    $region24: #{tpu_custom_call.1} parent=1 // pred_region
      %s221 = ssub.s32 128, 128
      %222 = vsyncadd [#allocation3], %s221
      %s224 = sshll.u32 [#allocation2], 4
      %s225 = int_to_ptr.vmem [resolvable:$true] %s224
      %227 = dma.vmem_to_hbm [thread:$0]  %s225, 128, %s5, [#allocation3]
    $region25: #{tpu_custom_call.1} parent=1 // pred_fallthru
      _
    // Predicated region
    $region26: #{tpu_custom_call.1} parent=1 // pred_check
      _
    $region27: #{tpu_custom_call.1} parent=1 // pred_check_branch
      %229 = sbr.rel (0) target = $region29
    $region28: #{tpu_custom_call.1} parent=1 // pred_region
      %230 = dma.done [#allocation3], 128
    $region29: #{tpu_custom_call.1} parent=1 // pred_fallthru
      _
    %231 = vsyncpa [#allocation3], 1

</llo_original>
